<compile_context>
chip_gen: v7x
topology: tpu7x:2x2x1
jax: 0.10.0
libtpu: 0.0.40
codegen_flags: <defaults>
</compile_context>

<pallas_src>
import jax
import jax.numpy as jnp
from jax.experimental import pallas as pl
from jax.experimental.pallas import tpu as pltpu


_LANE_WIDTHS = (4096, 2048, 1024, 512, 256, 128)   # words; multiples of 128
_TARGET_BLOCK_BYTES = 4 * 1024 * 1024              # ~4 MiB per block


def _copy_kernel(x_ref, o_ref):
    # Identity copy of one block: HBM -> VMEM (auto-pipelined DMA) -> HBM.
    o_ref[...] = x_ref[...]


def _choose_geometry(m):
    """Factor m into (rows, cols) with cols lane-dense (multiple of 128) if possible."""
    for w in _LANE_WIDTHS:                       # prefer wide, with >= 8 rows
        if m % w == 0 and m // w >= 8:
            return m // w, w
    for w in _LANE_WIDTHS:                       # tiny arrays: any lane-dense width
        if m % w == 0:
            return m // w, w
    # Rare fallback: m has no factor that is a multiple of 128.  Use the
    # largest divisor <= 4096 as the (full-extent) last dim; correct, just not
    # lane-dense.  # TODO(synk): split main/tail for large non-128-multiple m.
    for w in range(min(4096, m), 0, -1):
        if m % w == 0:
            return m // w, w
    return m, 1


def _choose_block_rows(rows, cols, itemsize):
    """Sublane-aligned block row count targeting ~4 MiB per block."""
    sub = max(8, 32 // max(1, itemsize))         # dtype min sublane tile (8/16/32)
    br = max(1, _TARGET_BLOCK_BYTES // max(1, cols * itemsize))
    br = (br // sub) * sub
    if br == 0 or br >= rows:
        if rows >= 2 * sub:
            # Keep >= 2 grid steps so v7x's two TensorCores both get work.
            return max(sub, (pl.cdiv(rows, 2) // sub) * sub)
        return rows                              # single full-extent block
    return br


def _pallas_copy_2d(x2d):
    """Identity copy of a 2-D array via a 1-D parallel grid of large blocks."""
    rows, cols = x2d.shape
    itemsize = x2d.dtype.itemsize
    br = _choose_block_rows(rows, cols, itemsize)
    grid = (pl.cdiv(rows, br),)                  # partial edge block masked by Pallas
    return pl.pallas_call(
        _copy_kernel,
        out_shape=jax.ShapeDtypeStruct((rows, cols), x2d.dtype),
        grid=grid,
        in_specs=[pl.BlockSpec((br, cols), lambda i: (i, 0))],
        out_specs=pl.BlockSpec((br, cols), lambda i: (i, 0)),
        compiler_params=pltpu.CompilerParams(
            dimension_semantics=("parallel",),
            vmem_limit_bytes=32 * 1024 * 1024,
        ),
    )(x2d)


def _identity_copy_flat(flat):
    """Copy a flat contiguous buffer through the Pallas kernel (no pad/slice)."""
    n = flat.shape[0]
    if n == 0:
        return flat
    dtype = flat.dtype
    itemsize = dtype.itemsize
    arr = flat
    packed = 1
    if itemsize < 4 and dtype != jnp.bool_ and n % (4 // itemsize) == 0:
        # Pack sub-32-bit elements into uint32 words: full-width loads/stores,
        # dtype-agnostic kernel, 2-4x fewer elements seen by the DMA engines.
        packed = 4 // itemsize
        arr = jax.lax.bitcast_convert_type(
            flat.reshape(n // packed, packed), jnp.uint32)
    m = arr.shape[0]
    rows, cols = _choose_geometry(m)
    out2d = _pallas_copy_2d(arr.reshape(rows, cols))   # metadata-only reshape
    out = out2d.reshape(m)
    if packed > 1:
        out = jax.lax.bitcast_convert_type(out, dtype).reshape(n)
    return out


def reshape_pallas(x, shape):
    """Equivalent of torch.Tensor.view(shape) for a contiguous (row-major) tensor.

    Supports a single -1 in `shape`, like torch.view.
    """
    total = x.size
    shape = list(shape)
    if -1 in shape:
        idx = shape.index(-1)
        known = 1
        for j, s in enumerate(shape):
            if j != idx:
                known *= s
        assert known > 0 and total % known == 0, "invalid shape for view"
        shape[idx] = total // known
    prod = 1
    for s in shape:
        prod *= s
    assert prod == total, "view shape must preserve number of elements"

    # NOTE: a true .view() is metadata-only; plain jnp.reshape would already be
    # optimal (zero HBM traffic).  The Pallas kernel performs the data movement
    # explicitly and therefore adds one full-tensor HBM read+write pass.
    flat = x.reshape(-1)                   # metadata-only (row-major contiguous)
    copied = _identity_copy_flat(flat)     # hot path: Pallas identity copy
    return copied.reshape(tuple(shape))    # metadata-only


class Reshape:
    """Mirror of the PyTorch module: Reshape(*args)(x) == x.view(args)."""

    def __init__(self, *args):
        self.shape = args

    def __call__(self, x):
        return reshape_pallas(x, self.shape)


if __name__ == "__main__":
    key = jax.random.PRNGKey(0)

    # Primary check: NCHW input, flatten per-batch features (matches the spec).
    x = jax.random.normal(key, (2, 4, 16, 16), dtype=jnp.float32)
    y = jax.block_until_ready(Reshape(2, -1)(x))
    assert y.shape == (2, 4 * 16 * 16)
    assert y.dtype == x.dtype
    assert bool(jnp.array_equal(y, x.reshape(2, -1)))

    # Multi-step parallel grid with a masked partial edge block
    # (30 x 1024 words, 8-row blocks -> grid of 4, last block 6 rows).
    k1, k2 = jax.random.split(key)
    x2 = jax.random.normal(k1, (2, 5, 24, 128), dtype=jnp.float32)
    y2 = jax.block_until_ready(Reshape(10, -1)(x2))
    assert bool(jnp.array_equal(y2, x2.reshape(10, -1)))

    # Sub-32-bit dtype: bf16 goes through the uint32-packed path.
    x3 = jax.random.normal(k2, (2, 4, 8, 32), dtype=jnp.bfloat16)
    y3 = jax.block_until_ready(Reshape(-1, 32)(x3))
    assert y3.dtype == x3.dtype
    assert bool(jnp.array_equal(y3, x3.reshape(-1, 32)))

    print("KERNEL_OK")
</pallas_src>

<mosaic_0001>
module attributes {stable_mosaic.version = 11 : i64} {
  func.func @_copy_kernel(%arg0: i32, %arg1: memref<8x256xf32, #tpu.memory_space<vmem>>, %arg2: memref<8x256xf32, #tpu.memory_space<vmem>>) attributes {dimension_semantics = [#tpu.dimension_semantics<parallel>], iteration_bounds = array<i64: 1>, scalar_prefetch = 0 : i64, scratch_operands = 0 : i64, tpu.core_type = #tpu.core_type<tc>, window_params = [{transform_indices = @transform_0, window_bounds = array<i64: 8, 256>}, {transform_indices = @transform_1, window_bounds = array<i64: 8, 256>}]} {
    %c0 = arith.constant 0 : index
    %c0_0 = arith.constant 0 : index
    %0 = vector.load %arg1[%c0, %c0_0] : memref<8x256xf32, #tpu.memory_space<vmem>>, vector<8x256xf32>
    %c0_1 = arith.constant 0 : index
    %c0_2 = arith.constant 0 : index
    %1 = vector.load %arg2[%c0_1, %c0_2] : memref<8x256xf32, #tpu.memory_space<vmem>>, vector<8x256xf32>
    tpu.vector_store %arg2[%c0_1, %c0_2], %0 {strides = array<i32>} : memref<8x256xf32, #tpu.memory_space<vmem>>, vector<8x256xf32>,
    return
  }
  func.func @transform_0(%arg0: i32) -> (i32, i32) {
    %c0_i32 = arith.constant 0 : i32
    %c0_i32_0 = arith.constant 0 : i32
    return %arg0, %c0_i32 : i32, i32
  }
  func.func @transform_1(%arg0: i32) -> (i32, i32) {
    %c0_i32 = arith.constant 0 : i32
    %c0_i32_0 = arith.constant 0 : i32
    return %arg0, %c0_i32 : i32, i32
  }
}

</mosaic_0001>

<llo_original>
// kernel: tpu_custom_call.1
$region0: #{tpu_custom_call.1}
  #allocation0 [shape = 'u32[]', space=smem, size = 0x4, offset = 0x4, fixed_abs, tag = 'smem constant byte address 0x4 - core index']
  #allocation1 [shape = 'u32[144,128]{1,0:T(1,128)}', space=vmem, size = 0x12000, scoped, tag = 'internal scratch']
  %s0 = inlined_call_operand.hbm [shape: f32[8,256], index: 0, kind: input, shape index: {}]
  %s1 = inlined_call_operand.hbm [shape: f32[8,256], index: 1, kind: output, shape index: {}]
  %s2 = sld [smem:[#allocation0]]
  $region18: #{tpu_custom_call.1} parent=0
    _
  %s4 = ssub.s32 1, %s2
  %s5 = scalar_select 0, %s4, %s2
  $region1: #{tpu_custom_call.1} parent=0
    #allocation2 [shape = 'u8[8192]{0}', space=vmem, size = 0x2000, scoped, tag = 'input window, operand 0, single buffered']
    #allocation3 [shape = 's32[1]{0}', space=sflag, size = 0x4, scoped, tag = 'scoped memory for tpu_custom_call.1']
    #allocation4 [shape = 's32[1]{0}', space=sflag, size = 0x4, scoped, tag = 'scoped memory for tpu_custom_call.1']
    #allocation5 [shape = 'u8[8192]{0}', space=vmem, size = 0x2000, scoped, tag = 'output window, operand 0, single buffered']
    %6 = vsyncpa [#allocation3], 0
    %7 = vsyncpa [#allocation4], 0
    // Predicated region
    $region2: #{tpu_custom_call.1} parent=1 // pred_check
      _
    $region3: #{tpu_custom_call.1} parent=1 // pred_check_branch
      %9 = sbr.rel (0) target = $region5
    $region4: #{tpu_custom_call.1} parent=1 // pred_region
      %s11 = ssub.s32 256, 256
      %12 = vsyncadd [#allocation3], %s11
      %s14 = sshll.u32 [#allocation2], 4
      %s15 = int_to_ptr.vmem [resolvable:$true] %s14
      %17 = dma.hbm_to_vmem [thread:$0]  %s0, 256, %s15, [#allocation3]
    $region5: #{tpu_custom_call.1} parent=1 // pred_fallthru
      _
    // Predicated region
    $region6: #{tpu_custom_call.1} parent=1 // pred_check
      _
    $region7: #{tpu_custom_call.1} parent=1 // pred_check_branch
      %19 = sbr.rel (0) target = $region9
    $region8: #{tpu_custom_call.1} parent=1 // pred_region
      %20 = dma.done [#allocation3], 256
    $region9: #{tpu_custom_call.1} parent=1 // pred_fallthru
      _
    %v21 = vld [vmem:[#allocation2] sm:$0xff]
    %v22 = vld [vmem:[#allocation2 + $0x8] sm:$0xff]
    %23 = vst [vmem:[#allocation5] sm:$0xff] %v21
    %24 = vst [vmem:[#allocation5 + $0x8] sm:$0xff] %v22
    // Predicated region
    $region10: #{tpu_custom_call.1} parent=1 // pred_check
      _
    $region11: #{tpu_custom_call.1} parent=1 // pred_check_branch
      %26 = sbr.rel (0) target = $region13
    $region12: #{tpu_custom_call.1} parent=1 // pred_region
      %s28 = ssub.s32 256, 256
      %29 = vsyncadd [#allocation4], %s28
      %s31 = sshll.u32 [#allocation5], 4
      %s32 = int_to_ptr.vmem [resolvable:$true] %s31
      %34 = dma.vmem_to_hbm [thread:$0]  %s32, 256, %s1, [#allocation4]
    $region13: #{tpu_custom_call.1} parent=1 // pred_fallthru
      _
    // Predicated region
    $region14: #{tpu_custom_call.1} parent=1 // pred_check
      _
    $region15: #{tpu_custom_call.1} parent=1 // pred_check_branch
      %36 = sbr.rel (0) target = $region17
    $region16: #{tpu_custom_call.1} parent=1 // pred_region
      %37 = dma.done [#allocation4], 256
    $region17: #{tpu_custom_call.1} parent=1 // pred_fallthru
      _
    %38 = vsyncpa [#allocation3], 1
    %39 = vsyncpa [#allocation4], 1

</llo_original>
